<compile_context>
chip_gen: v6e
topology: v6e:2x2x1
jax: 0.10.0
libtpu: 0.0.40
codegen_flags: <defaults>
</compile_context>

<pallas_src>
import functools

import jax
import jax.numpy as jnp
from jax import lax
from jax.experimental import pallas as pl
from jax.experimental.pallas import tpu as pltpu


def _round_up(x: int, m: int) -> int:
    return (x + m - 1) // m * m


def _cdiv(a: int, b: int) -> int:
    return (a + b - 1) // b


def _tpu_generation():
    """Best-effort (vmem_physical_bytes, is_v5_or_older, multi_tensorcore)."""
    vmem_phys = 128 * 1024 * 1024
    is_v5 = False
    multi_tc = False
    try:
        info = pltpu.get_tpu_info()
        v = getattr(info, "vmem_capacity_bytes", None)
        if v:
            vmem_phys = int(v)
    except Exception:
        pass
    try:
        kind = jax.devices()[0].device_kind.lower()
        if any(g in kind for g in ("v2", "v3", "v4", "v5")):
            is_v5 = True
        if "v7" in kind:
            multi_tc = True
            vmem_phys = min(vmem_phys, 64 * 1024 * 1024)
    except Exception:
        pass
    return vmem_phys, is_v5, multi_tc


def _vmem_estimate(tm, b_cols, d_pad, q_itemsize, p_itemsize, side_itemsize):
    """Rough VMEM footprint (bytes) for one grid step, incl. double-buffering + intermediates."""
    q_blk = tm * d_pad * q_itemsize
    p_res = b_cols * d_pad * p_itemsize
    side_blk = tm * max(b_cols, 1) * side_itemsize
    out_blk = 8 * 128 * 4
    inter = 6 * tm * b_cols * 4          # logits / exp / pos f32 live values
    return 2 * (q_blk + side_blk + out_blk) + 2 * p_res + inter + (1 << 20)


def _write_partials(out_ref, loss_sum, n_valid):
    """Write [loss_sum, n_valid] into positions (0,0)/(0,1) of an (8,128) output tile."""
    r = lax.broadcasted_iota(jnp.int32, (8, 128), 0)
    c = lax.broadcasted_iota(jnp.int32, (8, 128), 1)
    out_ref[...] = jnp.where((r == 0) & (c == 0), loss_sum,
                             jnp.where((r == 0) & (c == 1), n_valid, 0.0))


def _row_block_loss(q, p, pos, *, batch_size, block_rows, inv_temp, scale, mxu_dtype):
    """Shared per-row-block math. q:(TM,Dp) f32, p:(B,Dp) mxu_dtype, pos:(TM,B) f32."""
    # F.normalize(q, p=2, dim=1) with 1/temperature folded in.
    # eps clamp on the SQUARED norm is 1e-24 == (1e-12)^2 to preserve max(||x||,1e-12).
    sq = jnp.sum(q * q, axis=1, keepdims=True)                        # (TM, 1)
    qn = q * (lax.rsqrt(jnp.maximum(sq, 1e-24)) * inv_temp)           # (TM, Dp)

    # MXU matmul, contraction over D on both operands (no transposed copy of p).
    # p is already in mxu_dtype (cast once in the wrapper).
    logits = lax.dot_general(
        qn.astype(mxu_dtype), p,
        dimension_numbers=(((1,), (1,)), ((), ())),
        preferred_element_type=jnp.float32)                           # (TM, B)

    logits = logits - jnp.max(logits, axis=1, keepdims=True)
    # positives_mask + negatives_mask == 1 -> denominator is the plain row sum.
    denom = jnp.sum(jnp.exp(logits), axis=1, keepdims=True)           # (TM, 1)

    num_pos = jnp.sum(pos, axis=1, keepdims=True)                     # (TM, 1)
    # sum_j (logits - log denom) * pos  ==  sum_j logits*pos - num_pos*log denom
    row_sum = jnp.sum(logits * pos, axis=1, keepdims=True) - num_pos * jnp.log(denom)

    # Valid rows: at least one positive AND not a padding row of this block.
    row_ids = (pl.program_id(0) * block_rows
               + lax.broadcasted_iota(jnp.int32, (block_rows, 1), 0))
    valid = (num_pos > 0.0) & (row_ids < batch_size)                  # (TM, 1) bool

    per_row = jnp.where(valid, row_sum / jnp.where(valid, num_pos, 1.0), 0.0)
    loss_rows = -per_row * scale
    return jnp.sum(loss_rows), jnp.sum(valid.astype(jnp.float32))


def _contrast_loss_ids_kernel(ids_col_ref, ids_row_ref, q_ref, p_ref, out_ref, *,
                              batch_size, block_rows, inv_temp, scale, mxu_dtype):
    """Default / labels path: positives mask built in-kernel from int32 ids (no [B,B] DMA)."""
    q = q_ref[...].astype(jnp.float32)                                # (TM, Dp)
    p = p_ref[...]                                                    # (B, Dp), mxu_dtype
    pos = (ids_col_ref[...] == ids_row_ref[...]).astype(jnp.float32)  # (TM,1)==(1,B) -> (TM,B)
    loss_sum, n_valid = _row_block_loss(
        q, p, pos, batch_size=batch_size, block_rows=block_rows,
        inv_temp=inv_temp, scale=scale, mxu_dtype=mxu_dtype)
    _write_partials(out_ref, loss_sum, n_valid)


def _contrast_loss_mask_kernel(q_ref, p_ref, mask_ref, out_ref, *,
                               batch_size, block_rows, inv_temp, scale, mxu_dtype):
    """Explicit-mask path (mask streamed as bf16, cast to f32 per-tile)."""
    q = q_ref[...].astype(jnp.float32)                                # (TM, Dp)
    p = p_ref[...]                                                    # (B, Dp), mxu_dtype
    pos = mask_ref[...].astype(jnp.float32)                           # (TM, B)
    loss_sum, n_valid = _row_block_loss(
        q, p, pos, batch_size=batch_size, block_rows=block_rows,
        inv_temp=inv_temp, scale=scale, mxu_dtype=mxu_dtype)
    _write_partials(out_ref, loss_sum, n_valid)


def contrast_loss(features_q, features_p, labels=None, mask=None,
                  temperature=0.5, scale_by_temperature=True,
                  mxu_dtype=jnp.bfloat16, block_rows=None):
    """Pallas TPU implementation of ContrastLoss.forward (labels XOR mask XOR neither).

    If your mask is derived from labels upstream, prefer passing `labels` directly: the ids
    path avoids DMAing a [B,B] mask entirely.

    mxu_dtype: dtype fed to the MXU (bf16 default; f32 for exact-parity checks).
    block_rows: row-tile size (generation-aware auto if None); rows padded to a multiple of it.
    """
    if labels is not None and mask is not None:
        raise ValueError("Cannot define both `labels` and `mask`")

    features_q = jnp.asarray(features_q)
    features_p = jnp.asarray(features_p)
    batch_size, hidden = features_q.shape

    # Pad hidden (lane dim) to a multiple of 128: zero columns change neither the L2 norm
    # nor the dot product, and give full-width vector loads / full MXU K-tiles.
    d_pad = _round_up(hidden, 128)
    if d_pad != hidden:
        features_q = jnp.pad(features_q, ((0, 0), (0, d_pad - hidden)))
        features_p = jnp.pad(features_p, ((0, 0), (0, d_pad - hidden)))

    # One-time cast of the resident p to the MXU dtype (no per-grid-step VPU cast,
    # half its HBM traffic and VMEM footprint when bf16).
    p = features_p.astype(mxu_dtype)

    vmem_phys, is_v5, multi_tc = _tpu_generation()
    cap = max(32 << 20, min(int(0.75 * vmem_phys), 100 << 20))

    q_itemsize = jnp.dtype(features_q.dtype).itemsize
    p_itemsize = jnp.dtype(mxu_dtype).itemsize
    side_itemsize = 2 if mask is not None else 4     # bf16 mask tile vs. tiny int32 ids

    if block_rows is not None:
        tm = _round_up(int(block_rows), 8)
    else:
        tm = 128
        # v6e/v7x MXU is 256 wide along M: use TM=256 for large batches if it fits VMEM.
        if batch_size >= 512 and not is_v5:
            if _vmem_estimate(256, batch_size, d_pad, q_itemsize,
                              p_itemsize, side_itemsize) <= int(0.7 * cap):
                tm = 256
        # On multi-TensorCore chips make sure the "parallel" row axis has >= 2 blocks.
        if multi_tc:
            tm = min(tm, max(8, _round_up(_cdiv(batch_size, 2), 8)))
        tm = min(tm, _round_up(batch_size, 8))

    b_pad = _round_up(batch_size, tm)
    grid = b_pad // tm

    q = features_q
    if b_pad != batch_size:
        q = jnp.pad(q, ((0, b_pad - batch_size), (0, 0)))

    est = _vmem_estimate(tm, batch_size, d_pad, q_itemsize, p_itemsize, side_itemsize)
    vmem_limit = max(32 << 20, min(cap, int(1.5 * est)))

    common = dict(batch_size=batch_size, block_rows=tm,
                  inv_temp=1.0 / float(temperature),
                  scale=float(temperature) if scale_by_temperature else 1.0,
                  mxu_dtype=mxu_dtype)

    out_shape = jax.ShapeDtypeStruct((grid * 8, 128), jnp.float32)
    out_spec = pl.BlockSpec((8, 128), lambda i: (i, 0))
    cparams = pltpu.CompilerParams(
        dimension_semantics=("parallel",),            # row blocks split across TCs on v7x
        vmem_limit_bytes=int(vmem_limit),
    )

    if mask is None:
        if labels is not None:
            ids = jnp.asarray(labels).reshape(-1).astype(jnp.int32)
        else:
            ids = jnp.arange(batch_size, dtype=jnp.int32)   # identity mask
        ids_col = ids.reshape(batch_size, 1)
        if b_pad != batch_size:
            ids_col = jnp.pad(ids_col, ((0, b_pad - batch_size), (0, 0)))
        ids_row = ids.reshape(1, batch_size)
        kernel = functools.partial(_contrast_loss_ids_kernel, **common)
        out = pl.pallas_call(
            kernel,
            out_shape=out_shape,
            grid=(grid,),
            in_specs=[
                pl.BlockSpec((tm, 1), lambda i: (i, 0)),                 # ids per row block
                pl.BlockSpec((1, batch_size), lambda i: (0, 0)),         # ids (columns), resident
                pl.BlockSpec((tm, d_pad), lambda i: (i, 0)),             # q row block
                pl.BlockSpec((batch_size, d_pad), lambda i: (0, 0)),     # p, resident (mxu_dtype)
            ],
            out_specs=out_spec,
            compiler_params=cparams,
        )(ids_col, ids_row, q, p)
    else:
        # bf16 mask stream: exact for 0/1 masks, half the [B,B] HBM traffic / VMEM block.
        m = jnp.asarray(mask).astype(jnp.bfloat16)
        if b_pad != batch_size:
            m = jnp.pad(m, ((0, b_pad - batch_size), (0, 0)))
        kernel = functools.partial(_contrast_loss_mask_kernel, **common)
        out = pl.pallas_call(
            kernel,
            out_shape=out_shape,
            grid=(grid,),
            in_specs=[
                pl.BlockSpec((tm, d_pad), lambda i: (i, 0)),             # q row block
                pl.BlockSpec((batch_size, d_pad), lambda i: (0, 0)),     # p, resident (mxu_dtype)
                pl.BlockSpec((tm, batch_size), lambda i: (i, 0)),        # mask row block (bf16)
            ],
            out_specs=out_spec,
            compiler_params=cparams,
        )(q, p, m)

    partials = jnp.sum(out, axis=0)       # [sum_loss, n_valid, 0, ...]
    # NaN if no row has a positive -- matches torch's mean over an empty selection.
    return partials[0] / partials[1]


def _reference_loss(features_q, features_p, mask, temperature, scale_by_temperature):
    """Pure-JAX reference faithful to the PyTorch module."""
    q = features_q / jnp.maximum(
        jnp.linalg.norm(features_q, axis=1, keepdims=True), 1e-12)
    logits = (q @ features_p.T) / temperature
    logits = logits - jnp.max(logits, axis=1, keepdims=True)
    exp_logits = jnp.exp(logits)
    pos = mask
    neg = 1.0 - mask
    num_pos = jnp.sum(pos, axis=1)
    denom = (jnp.sum(exp_logits * neg, axis=1, keepdims=True)
             + jnp.sum(exp_logits * pos, axis=1, keepdims=True))
    log_probs = logits - jnp.log(denom)
    row = jnp.sum(log_probs * pos, axis=1)
    valid = num_pos > 0
    per_row = jnp.where(valid, row / jnp.where(valid, num_pos, 1.0), 0.0)
    loss = -per_row
    if scale_by_temperature:
        loss = loss * temperature
    return jnp.sum(jnp.where(valid, loss, 0.0)) / jnp.sum(valid.astype(jnp.float32))


if __name__ == "__main__":
    key = jax.random.PRNGKey(0)
    kq, kp, k2 = jax.random.split(key, 3)
    batch, hidden = 8, 32
    features_q = jax.random.normal(kq, (batch, hidden), dtype=jnp.float32)
    features_p = jax.random.normal(kp, (batch, hidden), dtype=jnp.float32)

    # 1) Default path (identity mask), exact f32 MXU path vs. module-faithful reference.
    loss = contrast_loss(features_q, features_p, temperature=0.5,
                         scale_by_temperature=True, mxu_dtype=jnp.float32)
    loss = jax.block_until_ready(loss)
    ref = _reference_loss(features_q, features_p, jnp.eye(batch, dtype=jnp.float32),
                          0.5, True)
    assert jnp.allclose(loss, ref, rtol=1e-5, atol=1e-5), (loss, ref)

    # 2) Labels path (mask built in-kernel from int32 labels; no [B,B] mask DMA).
    labels = jnp.array([0, 1, 0, 1, 2, 2, 3, 3], dtype=jnp.int32)
    loss_lbl = contrast_loss(features_q, features_p, labels=labels, temperature=0.5,
                             scale_by_temperature=True, mxu_dtype=jnp.float32)
    loss_lbl = jax.block_until_ready(loss_lbl)
    mask_lbl = (labels[:, None] == labels[None, :]).astype(jnp.float32)
    ref_lbl = _reference_loss(features_q, features_p, mask_lbl, 0.5, True)
    assert jnp.allclose(loss_lbl, ref_lbl, rtol=1e-5, atol=1e-5), (loss_lbl, ref_lbl)

    # 3) Explicit-mask path with a multi-block row grid + row padding (B=20, TM=16).
    batch2 = 20
    kq2, kp2 = jax.random.split(k2)
    q2 = jax.random.normal(kq2, (batch2, hidden), dtype=jnp.float32)
    p2 = jax.random.normal(kp2, (batch2, hidden), dtype=jnp.float32)
    labels2 = jnp.arange(batch2, dtype=jnp.int32) % 5
    mask2 = (labels2[:, None] == labels2[None, :]).astype(jnp.float32)
    loss2 = contrast_loss(q2, p2, mask=mask2, temperature=0.5,
                          scale_by_temperature=True, mxu_dtype=jnp.float32,
                          block_rows=16)
    loss2 = jax.block_until_ready(loss2)
    ref2 = _reference_loss(q2, p2, mask2, 0.5, True)
    assert jnp.allclose(loss2, ref2, rtol=1e-5, atol=1e-5), (loss2, ref2)

    # 4) Production default: bf16 MXU inputs / bf16 resident p (f32 accumulation).
    loss_bf16 = contrast_loss(features_q, features_p, temperature=0.5,
                              scale_by_temperature=True, mxu_dtype=jnp.bfloat16)
    loss_bf16 = jax.block_until_ready(loss_bf16)
    assert jnp.allclose(loss_bf16, ref, rtol=5e-2, atol=5e-2), (loss_bf16, ref)

    print("KERNEL_OK")
</pallas_src>

<mosaic_0001>
module attributes {stable_mosaic.version = 11 : i64} {
  func.func @_contrast_loss_ids_kernel(%arg0: i32, %arg1: memref<8x1xi32, #tpu.memory_space<vmem>>, %arg2: memref<1x8xi32, #tpu.memory_space<vmem>>, %arg3: memref<8x128xf32, #tpu.memory_space<vmem>>, %arg4: memref<8x128xf32, #tpu.memory_space<vmem>>, %arg5: memref<8x128xf32, #tpu.memory_space<vmem>>) attributes {dimension_semantics = [#tpu.dimension_semantics<parallel>], iteration_bounds = array<i64: 1>, scalar_prefetch = 0 : i64, scratch_operands = 0 : i64, tpu.core_type = #tpu.core_type<tc>, window_params = [{transform_indices = @transform_0, window_bounds = array<i64: 8, 1>}, {pipeline_mode = #tpu.pipeline_mode<synchronous>, transform_indices = @transform_1, window_bounds = array<i64: 1, 8>}, {transform_indices = @transform_2, window_bounds = array<i64: 8, 128>}, {pipeline_mode = #tpu.pipeline_mode<synchronous>, transform_indices = @transform_3, window_bounds = array<i64: 8, 128>}, {transform_indices = @transform_4, window_bounds = array<i64: 8, 128>}]} {
    %c0 = arith.constant 0 : index
    %c0_0 = arith.constant 0 : index
    %0 = vector.load %arg3[%c0, %c0_0] : memref<8x128xf32, #tpu.memory_space<vmem>>, vector<8x128xf32>
    %c0_1 = arith.constant 0 : index
    %c0_2 = arith.constant 0 : index
    %1 = vector.load %arg4[%c0_1, %c0_2] : memref<8x128xf32, #tpu.memory_space<vmem>>, vector<8x128xf32>
    %c0_3 = arith.constant 0 : index
    %c0_4 = arith.constant 0 : index
    %2 = vector.load %arg1[%c0_3, %c0_4] : memref<8x1xi32, #tpu.memory_space<vmem>>, vector<8x1xi32>
    %c0_5 = arith.constant 0 : index
    %c0_6 = arith.constant 0 : index
    %3 = vector.load %arg2[%c0_5, %c0_6] : memref<1x8xi32, #tpu.memory_space<vmem>>, vector<1x8xi32>
    %4 = vector.broadcast %2 : vector<8x1xi32> to vector<8x8xi32>
    %5 = vector.broadcast %3 : vector<1x8xi32> to vector<8x8xi32>
    %6 = arith.cmpi eq, %4, %5 : vector<8x8xi32>
    %7 = arith.extui %6 : vector<8x8xi1> to vector<8x8xi32>
    %8 = arith.sitofp %7 : vector<8x8xi32> to vector<8x8xf32>
    %9 = arith.mulf %0, %0 : vector<8x128xf32>
    %cst = arith.constant dense<0.000000e+00> : vector<8xf32>
    %10 = vector.multi_reduction <add>, %9, %cst [1] : vector<8x128xf32> to vector<8xf32>
    %11 = vector.shape_cast %10 : vector<8xf32> to vector<8x1xf32>
    %cst_7 = arith.constant 1.000000e-24 : f32
    %12 = vector.broadcast %cst_7 : f32 to vector<8x1xf32>
    %13 = arith.maximumf %11, %12 : vector<8x1xf32>
    %14 = math.rsqrt %13 : vector<8x1xf32>
    %cst_8 = arith.constant 2.000000e+00 : f32
    %15 = vector.broadcast %cst_8 : f32 to vector<8x1xf32>
    %16 = arith.mulf %14, %15 : vector<8x1xf32>
    %17 = vector.broadcast %16 : vector<8x1xf32> to vector<8x128xf32>
    %18 = arith.mulf %0, %17 : vector<8x128xf32>
    %cst_9 = arith.constant dense<0.000000e+00> : vector<8x8xf32>
    %19 = tpu.matmul %18, %1, %cst_9 {dimension_numbers = #tpu.dot_dimension_numbers<[1], [1], [0], [0], [0, 0, 1, 0], [], []>} : vector<8x128xf32>, vector<8x128xf32>, vector<8x8xf32> -> vector<8x8xf32>
    %cst_10 = arith.constant dense<0xFF800000> : vector<8xf32>
    %20 = vector.multi_reduction <maximumf>, %19, %cst_10 [1] : vector<8x8xf32> to vector<8xf32>
    %21 = vector.shape_cast %20 : vector<8xf32> to vector<8x1xf32>
    %22 = vector.broadcast %21 : vector<8x1xf32> to vector<8x8xf32>
    %23 = arith.subf %19, %22 : vector<8x8xf32>
    %24 = math.exp %23 : vector<8x8xf32>
    %cst_11 = arith.constant dense<0.000000e+00> : vector<8xf32>
    %25 = vector.multi_reduction <add>, %24, %cst_11 [1] : vector<8x8xf32> to vector<8xf32>
    %26 = vector.shape_cast %25 : vector<8xf32> to vector<8x1xf32>
    %cst_12 = arith.constant dense<0.000000e+00> : vector<8xf32>
    %27 = vector.multi_reduction <add>, %8, %cst_12 [1] : vector<8x8xf32> to vector<8xf32>
    %28 = vector.shape_cast %27 : vector<8xf32> to vector<8x1xf32>
    %29 = arith.mulf %23, %8 : vector<8x8xf32>
    %cst_13 = arith.constant dense<0.000000e+00> : vector<8xf32>
    %30 = vector.multi_reduction <add>, %29, %cst_13 [1] : vector<8x8xf32> to vector<8xf32>
    %31 = vector.shape_cast %30 : vector<8xf32> to vector<8x1xf32>
    %32 = math.log %26 : vector<8x1xf32>
    %33 = arith.mulf %28, %32 : vector<8x1xf32>
    %34 = arith.subf %31, %33 : vector<8x1xf32>
    %c8_i32 = arith.constant 8 : i32
    %35 = arith.muli %arg0, %c8_i32 : i32
    %36 = tpu.iota {dimensions = array<i32: 0>} : vector<8x1xi32>
    %37 = vector.broadcast %35 : i32 to vector<8x1xi32>
    %38 = arith.addi %37, %36 : vector<8x1xi32>
    %cst_14 = arith.constant 0.000000e+00 : f32
    %39 = vector.broadcast %cst_14 : f32 to vector<8x1xf32>
    %40 = arith.cmpf ogt, %28, %39 : vector<8x1xf32>
    %c8_i32_15 = arith.constant 8 : i32
    %41 = vector.broadcast %c8_i32_15 : i32 to vector<8x1xi32>
    %42 = arith.cmpi slt, %38, %41 : vector<8x1xi32>
    %43 = arith.andi %40, %42 : vector<8x1xi1>
    %cst_16 = arith.constant 1.000000e+00 : f32
    %44 = vector.broadcast %cst_16 : f32 to vector<8x1xf32>
    %45 = arith.select %43, %28, %44 : vector<8x1xi1>, vector<8x1xf32>
    %46 = arith.divf %34, %45 : vector<8x1xf32>
    %cst_17 = arith.constant 0.000000e+00 : f32
    %47 = vector.broadcast %cst_17 : f32 to vector<8x1xf32>
    %48 = arith.select %43, %46, %47 : vector<8x1xi1>, vector<8x1xf32>
    %cst_18 = arith.constant 0.000000e+00 : f32
    %49 = vector.broadcast %cst_18 : f32 to vector<8x1xf32>
    %50 = arith.subf %49, %48 : vector<8x1xf32>
    %cst_19 = arith.constant 5.000000e-01 : f32
    %51 = vector.broadcast %cst_19 : f32 to vector<8x1xf32>
    %52 = arith.mulf %50, %51 : vector<8x1xf32>
    %53 = vector.shape_cast %52 : vector<8x1xf32> to vector<1x8x1xf32>
    %cst_20 = arith.constant dense<0.000000e+00> : vector<1xf32>
    %54 = vector.multi_reduction <add>, %53, %cst_20 [1, 2] : vector<1x8x1xf32> to vector<1xf32>
    %55 = vector.shape_cast %54 : vector<1xf32> to vector<1x1x1xf32>
    %56 = vector.extract %55[0, 0, 0] : f32 from vector<1x1x1xf32>
    %57 = arith.extui %43 : vector<8x1xi1> to vector<8x1xi32>
    %58 = arith.sitofp %57 : vector<8x1xi32> to vector<8x1xf32>
    %59 = vector.shape_cast %58 : vector<8x1xf32> to vector<1x8x1xf32>
    %cst_21 = arith.constant dense<0.000000e+00> : vector<1xf32>
    %60 = vector.multi_reduction <add>, %59, %cst_21 [1, 2] : vector<1x8x1xf32> to vector<1xf32>
    %61 = vector.shape_cast %60 : vector<1xf32> to vector<1x1x1xf32>
    %62 = vector.extract %61[0, 0, 0] : f32 from vector<1x1x1xf32>
    %63 = tpu.iota {dimensions = array<i32: 0>} : vector<8x128xi32>
    %64 = tpu.iota {dimensions = array<i32: 1>} : vector<8x128xi32>
    %c0_i32 = arith.constant 0 : i32
    %65 = vector.broadcast %c0_i32 : i32 to vector<8x128xi32>
    %66 = arith.cmpi eq, %63, %65 : vector<8x128xi32>
    %c0_i32_22 = arith.constant 0 : i32
    %67 = vector.broadcast %c0_i32_22 : i32 to vector<8x128xi32>
    %68 = arith.cmpi eq, %64, %67 : vector<8x128xi32>
    %69 = arith.andi %66, %68 : vector<8x128xi1>
    %c0_i32_23 = arith.constant 0 : i32
    %70 = vector.broadcast %c0_i32_23 : i32 to vector<8x128xi32>
    %71 = arith.cmpi eq, %63, %70 : vector<8x128xi32>
    %c1_i32 = arith.constant 1 : i32
    %72 = vector.broadcast %c1_i32 : i32 to vector<8x128xi32>
    %73 = arith.cmpi eq, %64, %72 : vector<8x128xi32>
    %74 = arith.andi %71, %73 : vector<8x128xi1>
    %cst_24 = arith.constant 0.000000e+00 : f32
    %75 = vector.broadcast %62 : f32 to vector<8x128xf32>
    %76 = vector.broadcast %cst_24 : f32 to vector<8x128xf32>
    %77 = arith.select %74, %75, %76 : vector<8x128xi1>, vector<8x128xf32>
    %78 = vector.broadcast %56 : f32 to vector<8x128xf32>
    %79 = arith.select %69, %78, %77 : vector<8x128xi1>, vector<8x128xf32>
    %c0_25 = arith.constant 0 : index
    %c0_26 = arith.constant 0 : index
    %80 = vector.load %arg5[%c0_25, %c0_26] : memref<8x128xf32, #tpu.memory_space<vmem>>, vector<8x128xf32>
    tpu.vector_store %arg5[%c0_25, %c0_26], %79 {strides = array<i32>} : memref<8x128xf32, #tpu.memory_space<vmem>>, vector<8x128xf32>,
    return
  }
  func.func @transform_0(%arg0: i32) -> (i32, i32) {
    %c0_i32 = arith.constant 0 : i32
    %c0_i32_0 = arith.constant 0 : i32
    return %arg0, %c0_i32 : i32, i32
  }
  func.func @transform_1(%arg0: i32) -> (i32, i32) {
    %c0_i32 = arith.constant 0 : i32
    %c0_i32_0 = arith.constant 0 : i32
    %c0_i32_1 = arith.constant 0 : i32
    return %c0_i32, %c0_i32_0 : i32, i32
  }
  func.func @transform_2(%arg0: i32) -> (i32, i32) {
    %c0_i32 = arith.constant 0 : i32
    %c0_i32_0 = arith.constant 0 : i32
    return %arg0, %c0_i32 : i32, i32
  }
  func.func @transform_3(%arg0: i32) -> (i32, i32) {
    %c0_i32 = arith.constant 0 : i32
    %c0_i32_0 = arith.constant 0 : i32
    %c0_i32_1 = arith.constant 0 : i32
    return %c0_i32, %c0_i32_0 : i32, i32
  }
  func.func @transform_4(%arg0: i32) -> (i32, i32) {
    %c0_i32 = arith.constant 0 : i32
    %c0_i32_0 = arith.constant 0 : i32
    return %arg0, %c0_i32 : i32, i32
  }
}

</mosaic_0001>

<llo_original>
// kernel: tpu_custom_call.1
$region0: #{tpu_custom_call.1}
  #allocation0 [shape = 'u32[]', space=smem, size = 0x4, offset = 0x4, fixed_abs, tag = 'smem constant byte address 0x4 - core index']
  #allocation1 [shape = 'u32[144,128]{1,0:T(1,128)}', space=vmem, size = 0x12000, scoped, tag = 'internal scratch']
  %s0 = inlined_call_operand.vmem [shape: s32[8,1], index: 0, kind: input, shape index: {}]
  %s1 = inlined_call_operand.vmem [shape: s32[1,8], index: 1, kind: input, shape index: {}]
  %s2 = inlined_call_operand.vmem [shape: f32[8,128], index: 2, kind: input, shape index: {}]
  %s3 = inlined_call_operand.hbm [shape: f32[8,128], index: 3, kind: input, shape index: {}]
  %s4 = inlined_call_operand.hbm [shape: f32[8,128], index: 4, kind: output, shape index: {}]
  %s5 = sld [smem:[#allocation0]]
  $region30: #{tpu_custom_call.1} parent=0
    _
  %s7 = ssub.s32 1, %s5
  %s8 = scalar_select 0, %s7, %s5
  $region1: #{tpu_custom_call.1} parent=0
    #allocation2 [shape = 'u8[4096]{0}', space=vmem, size = 0x1000, scoped, tag = 'input window, operand 3, single buffered']
    #allocation3 [shape = 's32[1]{0}', space=sflag, size = 0x4, scoped, tag = 'scoped memory for tpu_custom_call.1']
    #allocation4 [shape = 's32[1]{0}', space=sflag, size = 0x4, scoped, tag = 'scoped memory for tpu_custom_call.1']
    #allocation5 [shape = 'u8[4096]{0}', space=vmem, size = 0x1000, scoped, tag = 'output window, operand 0, single buffered']
    %9 = vsyncpa [#allocation3], 0
    %10 = vsyncpa [#allocation4], 0
    // Predicated region
    $region2: #{tpu_custom_call.1} parent=1 // pred_check
      _
    $region3: #{tpu_custom_call.1} parent=1 // pred_check_branch
      %12 = sbr.rel (0) target = $region5
    $region4: #{tpu_custom_call.1} parent=1 // pred_region
      _
    $region5: #{tpu_custom_call.1} parent=1 // pred_fallthru
      _
    // Predicated region
    $region6: #{tpu_custom_call.1} parent=1 // pred_check
      _
    $region7: #{tpu_custom_call.1} parent=1 // pred_check_branch
      %14 = sbr.rel (0) target = $region9
    $region8: #{tpu_custom_call.1} parent=1 // pred_region
      _
    $region9: #{tpu_custom_call.1} parent=1 // pred_fallthru
      _
    // Predicated region
    $region10: #{tpu_custom_call.1} parent=1 // pred_check
      _
    $region11: #{tpu_custom_call.1} parent=1 // pred_check_branch
      %16 = sbr.rel (0) target = $region13
    $region12: #{tpu_custom_call.1} parent=1 // pred_region
      _
    $region13: #{tpu_custom_call.1} parent=1 // pred_fallthru
      _
    // Predicated region
    $region14: #{tpu_custom_call.1} parent=1 // pred_check
      _
    $region15: #{tpu_custom_call.1} parent=1 // pred_check_branch
      %18 = sbr.rel (0) target = $region17
    $region16: #{tpu_custom_call.1} parent=1 // pred_region
      %s20 = ssub.s32 128, 128
      %21 = vsyncadd [#allocation3], %s20
      %s23 = sshll.u32 [#allocation2], 4
      %s24 = int_to_ptr.vmem [resolvable:$true] %s23
      %26 = dma.hbm_to_vmem [thread:$0]  %s3, 128, %s24, [#allocation3]
    $region17: #{tpu_custom_call.1} parent=1 // pred_fallthru
      _
    // Predicated region
    $region18: #{tpu_custom_call.1} parent=1 // pred_check
      _
    $region19: #{tpu_custom_call.1} parent=1 // pred_check_branch
      %28 = sbr.rel (0) target = $region21
    $region20: #{tpu_custom_call.1} parent=1 // pred_region
      %29 = dma.done [#allocation3], 128
    $region21: #{tpu_custom_call.1} parent=1 // pred_fallthru
      _
    %v30 = vld [vmem:[%s2] sm:$0xff]
    %v31 = vld [vmem:[#allocation2] sm:$0xff]
    %v32 = vld [vmem:[%s0] sm:$0xff]
    %v33 = vld [vmem:[%s1] sm:$0x1]
    %34 = vset.pattern.permute.xlu0 0
    %35 = vperm.xlu0 %34, %v32
    %v36 = vpop.permute.xlu0 %35
    %v37 = vlaneseq
    %v38 = vshrl.u32 %v37, 7
    %v39 = vsub.s32 0, %v38
    %v40 = vrot.slane %v33, %v39
    %vm41 = vcmp.eq.s32.totalorder %v36, %v40
    %v42 = vsel %vm41, 1, 0
    %v43 = vcvt.s32.f32 %v42
    %v44 = vmul.f32 %v30, %v30
    %45 = vadd.xlane.f32.xlu0 %v44
    %v46 = vpop.xlane.xlu0 %45
    %v47 = vmax.f32 %v46, 1e-24
    %v48 = vrsqrt.pop %v47
    %v49 = vmul.f32 %v48, 2.0
    %v50 = vmul.f32 %v30, %v49
    %51 = vmatprep.subr.mxu0 0.0
    %52 = vmatpush1.xpose.msra.mxu0 0.0
    %53 = vmatprep.subr.mxu0 0.0
    %54 = vmatpush1.xpose.msra.mxu0 0.0
    %55 = vmatprep.subr.mxu0 0.0
    %56 = vmatpush1.xpose.msra.mxu0 0.0
    %57 = vmatprep.subr.mxu0 0.0
    %58 = vmatpush1.xpose.msra.mxu0 0.0
    %59 = vmatprep.subr.mxu0 0.0
    %60 = vmatpush1.xpose.msra.mxu0 0.0
    %61 = vmatprep.subr.mxu0 0.0
    %62 = vmatpush1.xpose.msra.mxu0 0.0
    %63 = vmatprep.subr.mxu0 0.0
    %64 = vmatpush1.xpose.msra.mxu0 0.0
    %65 = vmatprep.subr.mxu0 0.0
    %66 = vmatpush1.xpose.msra.mxu0 0.0
    %67 = vmatprep.subr.mxu0 0.0
    %68 = vmatpush1.xpose.msra.mxu0 0.0
    %69 = vmatprep.subr.mxu0 0.0
    %70 = vmatpush1.xpose.msra.mxu0 0.0
    %71 = vmatprep.subr.mxu0 0.0
    %72 = vmatpush1.xpose.msra.mxu0 0.0
    %73 = vmatprep.subr.mxu0 0.0
    %74 = vmatpush1.xpose.msra.mxu0 0.0
    %75 = vmatprep.subr.mxu0 0.0
    %76 = vmatpush1.xpose.msra.mxu0 0.0
    %77 = vmatprep.subr.mxu0 0.0
    %78 = vmatpush1.xpose.msra.mxu0 0.0
    %79 = vmatprep.subr.mxu0 0.0
    %80 = vmatpush1.xpose.msra.mxu0 0.0
    %81 = vmatprep.subr.mxu0 0.0
    %82 = vmatpush1.xpose.msra.mxu0 %v31
    %83 = vmatprep.subr.mxu0 0.0
    %84 = vmatpush2.xpose.msra.mxu0 0.0
    %85 = vmatprep.subr.mxu0 0.0
    %86 = vmatpush2.xpose.msra.mxu0 0.0
    %87 = vmatprep.subr.mxu0 0.0
    %88 = vmatpush2.xpose.msra.mxu0 0.0
    %89 = vmatprep.subr.mxu0 0.0
    %90 = vmatpush2.xpose.msra.mxu0 0.0
    %91 = vmatprep.subr.mxu0 0.0
    %92 = vmatpush2.xpose.msra.mxu0 0.0
    %93 = vmatprep.subr.mxu0 0.0
    %94 = vmatpush2.xpose.msra.mxu0 0.0
    %95 = vmatprep.subr.mxu0 0.0
    %96 = vmatpush2.xpose.msra.mxu0 0.0
    %97 = vmatprep.subr.mxu0 0.0
    %98 = vmatpush2.xpose.msra.mxu0 0.0
    %99 = vmatprep.subr.mxu0 0.0
    %100 = vmatpush2.xpose.msra.mxu0 0.0
    %101 = vmatprep.subr.mxu0 0.0
    %102 = vmatpush2.xpose.msra.mxu0 0.0
    %103 = vmatprep.subr.mxu0 0.0
    %104 = vmatpush2.xpose.msra.mxu0 0.0
    %105 = vmatprep.subr.mxu0 0.0
    %106 = vmatpush2.xpose.msra.mxu0 0.0
    %107 = vmatprep.subr.mxu0 0.0
    %108 = vmatpush2.xpose.msra.mxu0 0.0
    %109 = vmatprep.subr.mxu0 0.0
    %110 = vmatpush2.xpose.msra.mxu0 0.0
    %111 = vmatprep.subr.mxu0 0.0
    %112 = vmatpush2.xpose.msra.mxu0 0.0
    %113 = vmatprep.subr.mxu0 0.0
    %114 = vmatpush2.xpose.msra.mxu0 0.0
    %115 = vmatprep.mubr.f32.mxu0 0.0
    %116 = vmatmul.mubr.f32.gmra.mxu0 %v50
    %v117 = vpop.f32.mrf.mxu0
    %v118 = vadd.f32 0.0, %v117
    %v119 = vpop.f32.mrf.mxu0
    %120 = vdwg.mxu0
    %vm121 = vcmask 64512
    %v122 = vsel %vm121, %v118, -inf
    %123 = vmax.xlane.f32.xlu0 %v122
    %v124 = vpop.xlane.xlu0 %123
    %v125 = vsub.f32 %v118, %v124
    %v126 = vmul.f32 %v125, 1.442695
    %v127 = vpow.pop %v126
    %v128 = vsel %vm121, %v127, 0.0
    %129 = vadd.xlane.f32.xlu0 %v128
    %v130 = vpop.xlane.xlu0 %129
    %v131 = vsel %vm121, %v43, 0.0
    %132 = vadd.xlane.f32.xlu0 %v131
    %v133 = vpop.xlane.xlu0 %132
    %v134 = vmul.f32 %v125, %v43
    %v135 = vsel %vm121, %v134, 0.0
    %136 = vadd.xlane.f32.xlu0 %v135
    %v137 = vpop.xlane.xlu0 %136
    %v138 = vlog2.pop %v130
    %v139 = vmul.f32 %v138, 0.6931472
    %v140 = vmul.f32 %v133, %v139
    %v141 = vsub.f32 %v137, %v140
    %s142 = smul.u32 0, 8
    %v143 = vlaneseq
    %v144 = vshrl.u32 %v143, 7
    %v145 = vstv %s142
    %v146 = vadd.s32 %v145, %v144
    %vm147 = vcmp.gt.f32.partialorder %v133, 0.0
    %vm148 = vcmp.lt.s32.totalorder %v146, 8
    %vm149 = vmand %vm147, %vm148
    %v150 = vsel %vm149, %v133, 1.0
    %v151 = vrcp.pop %v150
    %v152 = vmul.f32 %v141, %v151
    %v153 = vsel %vm149, %v152, 0.0
    %v154 = vsub.f32 0.0, %v153
    %v155 = vmul.f32 %v154, 0.5
    %vm156 = vcmask 7168
    %v157 = vsel %vm156, %v155, 0.0
    %158 = vadd.xlane.f32.xlu0 %v157
    %v159 = vpop.xlane.xlu0 %158
    %v160 = vrot.slane %v159, 4
    %v161 = vadd.f32 %v159, %v160
    %v162 = vrot.slane %v161, 2
    %v163 = vadd.f32 %v161, %v162
    %v164 = vrot.slane %v163, 1
    %v165 = vadd.f32 %v163, %v164
    %s166 = vtos %v165
    %v167 = vsel %vm149, 1, 0
    %v168 = vcvt.s32.f32 %v167
    %v169 = vsel %vm156, %v168, 0.0
    %170 = vadd.xlane.f32.xlu0 %v169
    %v171 = vpop.xlane.xlu0 %170
    %v172 = vrot.slane %v171, 4
    %v173 = vadd.f32 %v171, %v172
    %v174 = vrot.slane %v173, 2
    %v175 = vadd.f32 %v173, %v174
    %v176 = vrot.slane %v175, 1
    %v177 = vadd.f32 %v175, %v176
    %s178 = vtos %v177
    %v179 = vlaneseq
    %v180 = vand.u32 %v179, 127
    %vm181 = vcmp.eq.s32.totalorder %v144, 0
    %vm182 = vcmp.eq.s32.totalorder %v180, 0
    %vm183 = vmand %vm181, %vm182
    %vm184 = vcmp.eq.s32.totalorder %v180, 1
    %vm185 = vmand %vm181, %vm184
    %v186 = vstv %s178
    %v187 = vsel %vm185, %v186, 0.0
    %v188 = vstv %s166
    %v189 = vsel %vm183, %v188, %v187
    %190 = vst [vmem:[#allocation5] sm:$0xff] %v189
    // Predicated region
    $region22: #{tpu_custom_call.1} parent=1 // pred_check
      _
    $region23: #{tpu_custom_call.1} parent=1 // pred_check_branch
      %192 = sbr.rel (0) target = $region25
    $region24: #{tpu_custom_call.1} parent=1 // pred_region
      %s194 = ssub.s32 128, 128
      %195 = vsyncadd [#allocation4], %s194
      %s197 = sshll.u32 [#allocation5], 4
      %s198 = int_to_ptr.vmem [resolvable:$true] %s197
      %200 = dma.vmem_to_hbm [thread:$0]  %s198, 128, %s4, [#allocation4]
    $region25: #{tpu_custom_call.1} parent=1 // pred_fallthru
      _
    // Predicated region
    $region26: #{tpu_custom_call.1} parent=1 // pred_check
      _
    $region27: #{tpu_custom_call.1} parent=1 // pred_check_branch
      %202 = sbr.rel (0) target = $region29
    $region28: #{tpu_custom_call.1} parent=1 // pred_region
      %203 = dma.done [#allocation4], 128
    $region29: #{tpu_custom_call.1} parent=1 // pred_fallthru
      _
    %204 = vsyncpa [#allocation3], 1
    %205 = vsyncpa [#allocation4], 1

</llo_original>
